<compile_context>
chip_gen: v5e
topology: v5e:2x2
jax: 0.10.0
libtpu: 0.0.40
codegen_flags: <defaults>
</compile_context>

<pallas_src>
import functools
from itertools import permutations

import numpy as np
import jax
import jax.numpy as jnp
from jax.experimental import pallas as pl
from jax.experimental.pallas import tpu as pltpu

_EPS = 1e-8                      # F.cosine_similarity eps (clamp per-norm, as in the reference)
_PAD_LABEL = -(2 ** 31)          # sentinel label for padded rows


def _round_up(x, m):
    return (x + m - 1) // m * m


def _contrastive_loss_kernel(lab_i_ref, lab_j_ref, img_ref, txt_ref, out_ref,
                             img_n_ref, acc_ref, *, margin, n_true, block, padded):
    i = pl.program_id(0)
    j = pl.program_id(1)

    # --- init + hoisted img normalization: once per row block -----------------
    @pl.when(j == 0)
    def _():
        acc_ref[0] = jnp.float32(0.0)
        img = img_ref[...].astype(jnp.float32)                       # (T, D)
        inv = jax.lax.rsqrt(
            jnp.maximum(jnp.sum(img * img, axis=-1, keepdims=True), _EPS * _EPS))
        img_n_ref[...] = img * inv

    # --- normalize the current text tile (rsqrt -> EUP, mul -> VPU) -----------
    txt = txt_ref[...].astype(jnp.float32)                           # (T, D)
    inv_t = jax.lax.rsqrt(
        jnp.maximum(jnp.sum(txt * txt, axis=-1, keepdims=True), _EPS * _EPS))
    txt_n = txt * inv_t

    # --- cos(img_i, txt_j) for the whole tile on the MXU (no rhs transpose) ---
    sim = jax.lax.dot_general(img_n_ref[...], txt_n,
                              (((1,), (1,)), ((), ())),
                              preferred_element_type=jnp.float32)    # (T, T)

    # --- negatives: labels differ (padded rows excluded via sentinel label) ---
    lab_i = lab_i_ref[...]                                           # (T, 1)
    lab_j = lab_j_ref[...]                                           # (1, T)
    neg_mask = lab_i != lab_j
    if padded:
        neg_mask = jnp.logical_and(
            neg_mask,
            jnp.logical_and(lab_i != _PAD_LABEL, lab_j != _PAD_LABEL))
    neg_vals = jnp.maximum(sim - margin, 0.0)
    acc_ref[0] += jnp.sum(jnp.where(neg_mask, neg_vals, 0.0))

    # --- positives: diagonal entries, only on diagonal tiles -------------------
    @pl.when(i == j)
    def _():
        r = jax.lax.broadcasted_iota(jnp.int32, sim.shape, 0)
        c = jax.lax.broadcasted_iota(jnp.int32, sim.shape, 1)
        pos_mask = r == c
        if padded:
            pos_mask = jnp.logical_and(pos_mask, i * block + r < n_true)
        acc_ref[0] += jnp.sum(jnp.where(pos_mask, 1.0 - sim, 0.0))

    # --- write this row block's partial sum into lane 0 of its output block ---
    @pl.when(j == pl.num_programs(1) - 1)
    def _():
        lane = jax.lax.broadcasted_iota(jnp.int32, out_ref.shape, 2)
        out_ref[...] = jnp.where(lane == 0, acc_ref[0], 0.0)


@functools.partial(jax.jit, static_argnames=("margin", "block"))
def contrastive_loss(labels, img_emb, text_emb, margin=0.3, block=256):
    """labels: (N,) ints; img_emb/text_emb: (N, D) floats. Returns scalar f32 loss."""
    n, d = img_emb.shape
    lab = labels.astype(jnp.int32)

    # Tile size: multiple of 128 (lane/MXU aligned), capped by `block`.
    t = min(_round_up(max(int(block), 128), 128), _round_up(n, 128))
    n_pad = _round_up(n, t)
    padded = n_pad != n

    if padded:
        img_p = jnp.pad(img_emb, ((0, n_pad - n), (0, 0)))
        txt_p = jnp.pad(text_emb, ((0, n_pad - n), (0, 0)))
        lab_p = jnp.pad(lab, (0, n_pad - n), constant_values=_PAD_LABEL)
    else:
        img_p, txt_p, lab_p = img_emb, text_emb, lab

    lab_col = lab_p.reshape(n_pad, 1)   # img-row labels
    lab_row = lab_p.reshape(1, n_pad)   # txt-col labels

    gi = n_pad // t
    gj = n_pad // t

    kernel = functools.partial(_contrastive_loss_kernel, margin=float(margin),
                               n_true=n, block=t, padded=padded)

    grid_spec = pltpu.PrefetchScalarGridSpec(
        num_scalar_prefetch=0,
        grid=(gi, gj),
        in_specs=[
            pl.BlockSpec((t, 1), lambda i, j: (i, 0)),     # img labels  (T, 1)
            pl.BlockSpec((1, t), lambda i, j: (0, j)),     # txt labels  (1, T)
            pl.BlockSpec((t, d), lambda i, j: (i, 0)),     # img tile    (T, D)
            pl.BlockSpec((t, d), lambda i, j: (j, 0)),     # txt tile    (T, D)
        ],
        out_specs=pl.BlockSpec((1, 1, 128), lambda i, j: (i, 0, 0)),
        scratch_shapes=[
            pltpu.VMEM((t, d), jnp.float32),   # normalized img tile (reused over the j sweep)
            pltpu.SMEM((1,), jnp.float32),     # running partial sum for this row block
        ],
    )

    # Rough per-step VMEM footprint (double-buffered tiles + scratch + (T,T) temps);
    # only raise the scoped-VMEM limit when big tiles actually need it (cap <= 64 MiB
    # so the same config also fits v7x).
    est_bytes = 4 * (5 * t * d + 4 * t * t)
    compiler_kwargs = dict(dimension_semantics=("parallel", "arbitrary"))
    if est_bytes > 24 * 1024 * 1024:
        compiler_kwargs["vmem_limit_bytes"] = int(min(2 * est_bytes, 64 * 1024 * 1024))

    cost = pl.CostEstimate(
        flops=2 * n_pad * n_pad * d,
        transcendentals=(gi + gi * gj) * t,
        bytes_accessed=4 * d * n_pad * (1 + gi) + 4 * 2 * n_pad + 4 * gi * 128,
    )

    partials = pl.pallas_call(
        kernel,
        out_shape=jax.ShapeDtypeStruct((gi, 1, 128), jnp.float32),
        grid_spec=grid_spec,
        compiler_params=pltpu.CompilerParams(**compiler_kwargs),
        cost_estimate=cost,
    )(lab_col, lab_row, img_p, txt_p)

    pos_plus_neg = jnp.sum(partials)
    # Number of ordered label-mismatch pairs, computed once from the labels in the
    # wrapper (cheap; avoids reducing an (N, N) mask per tile inside the kernel).
    neg_cnt = jnp.sum((lab[:, None] != lab[None, :]).astype(jnp.float32))
    return pos_plus_neg / (jnp.float32(n) + neg_cnt)


def _reference(labels_np, img_np, txt_np, margin=0.3):
    """Pure-numpy replica of the PyTorch forward (for verification)."""
    def cos(a, b):
        na = np.maximum(np.linalg.norm(a, axis=-1), _EPS)
        nb = np.maximum(np.linalg.norm(b, axis=-1), _EPS)
        return np.sum(a * b, axis=-1) / (na * nb)

    n = len(labels_np)
    all_pairs = np.array(list(permutations(range(n), 2)))
    neg_sel = labels_np[all_pairs[:, 0]] != labels_np[all_pairs[:, 1]]
    neg_pairs = all_pairs[neg_sel.nonzero()]
    pos = 1.0 - cos(img_np, txt_np)
    neg = np.maximum(cos(img_np[neg_pairs[:, 0]], txt_np[neg_pairs[:, 1]]) - margin, 0.0)
    return np.concatenate([pos, neg], axis=0).mean()


if __name__ == "__main__":
    key = jax.random.PRNGKey(0)
    k1, k2, k3, k4, k5, k6 = jax.random.split(key, 6)

    # Test 1: tiny shape (single padded 128x128 tile).
    N1, D1 = 8, 32
    labels1 = jax.random.randint(k1, (N1,), 0, 3, dtype=jnp.int32)
    img1 = jax.random.normal(k2, (N1, D1), dtype=jnp.float32)
    txt1 = jax.random.normal(k3, (N1, D1), dtype=jnp.float32)
    loss1 = contrastive_loss(labels1, img1, txt1, margin=0.3)
    jax.block_until_ready(loss1)
    ref1 = _reference(np.asarray(labels1), np.asarray(img1), np.asarray(txt1), 0.3)
    np.testing.assert_allclose(float(loss1), float(ref1), rtol=2e-4, atol=2e-5)

    # Test 2: multi-tile 2x2 grid with padded rows (exercises accumulation + masking).
    N2, D2 = 200, 48
    labels2 = jax.random.randint(k4, (N2,), 0, 5, dtype=jnp.int32)
    img2 = jax.random.normal(k5, (N2, D2), dtype=jnp.float32)
    txt2 = jax.random.normal(k6, (N2, D2), dtype=jnp.float32)
    loss2 = contrastive_loss(labels2, img2, txt2, margin=0.3, block=128)
    jax.block_until_ready(loss2)
    ref2 = _reference(np.asarray(labels2), np.asarray(img2), np.asarray(txt2), 0.3)
    np.testing.assert_allclose(float(loss2), float(ref2), rtol=2e-4, atol=2e-5)

    print("KERNEL_OK")
</pallas_src>

<mosaic_0001>
module attributes {stable_mosaic.version = 11 : i64} {
  func.func @_contrastive_loss_kernel(%arg0: i32, %arg1: i32, %arg2: memref<128x1xi32, #tpu.memory_space<vmem>>, %arg3: memref<1x128xi32, #tpu.memory_space<vmem>>, %arg4: memref<128x32xf32, #tpu.memory_space<vmem>>, %arg5: memref<128x32xf32, #tpu.memory_space<vmem>>, %arg6: memref<1x1x128xf32, #tpu.memory_space<vmem>>, %arg7: memref<128x32xf32, #tpu.memory_space<vmem>>, %arg8: memref<1xf32, #tpu.memory_space<smem>>) attributes {dimension_semantics = [#tpu.dimension_semantics<parallel>, #tpu.dimension_semantics<arbitrary>], iteration_bounds = array<i64: 1, 1>, scalar_prefetch = 0 : i64, scratch_operands = 2 : i64, tpu.core_type = #tpu.core_type<tc>, window_params = [{transform_indices = @transform_0, window_bounds = array<i64: 128, 1>}, {transform_indices = @transform_1, window_bounds = array<i64: 1, 128>}, {transform_indices = @transform_2, window_bounds = array<i64: 128, 32>}, {transform_indices = @transform_3, window_bounds = array<i64: 128, 32>}, {transform_indices = @transform_4, window_bounds = array<i64: 1, 1, 128>}]} {
    %c0_i32 = arith.constant 0 : i32
    %0 = arith.cmpi eq, %arg1, %c0_i32 : i32
    %1 = arith.extui %0 : i1 to i32
    %c0_i32_0 = arith.constant 0 : i32
    %2 = arith.cmpi ne, %1, %c0_i32_0 : i32
    scf.if %2 {
      %cst_20 = arith.constant 0.000000e+00 : f32
      %c0_21 = arith.constant 0 : index
      %46 = memref.load %arg8[%c0_21] : memref<1xf32, #tpu.memory_space<smem>>
      memref.store %cst_20, %arg8[%c0_21] : memref<1xf32, #tpu.memory_space<smem>>
      %c0_22 = arith.constant 0 : index
      %c0_23 = arith.constant 0 : index
      %47 = vector.load %arg4[%c0_22, %c0_23] : memref<128x32xf32, #tpu.memory_space<vmem>>, vector<128x32xf32>
      %48 = arith.mulf %47, %47 : vector<128x32xf32>
      %cst_24 = arith.constant dense<0.000000e+00> : vector<128xf32>
      %49 = vector.multi_reduction <add>, %48, %cst_24 [1] : vector<128x32xf32> to vector<128xf32>
      %50 = vector.shape_cast %49 : vector<128xf32> to vector<128x1xf32>
      %cst_25 = arith.constant 1.000000e-16 : f32
      %51 = vector.broadcast %cst_25 : f32 to vector<128x1xf32>
      %52 = arith.maximumf %50, %51 : vector<128x1xf32>
      %53 = math.rsqrt %52 : vector<128x1xf32>
      %54 = vector.broadcast %53 : vector<128x1xf32> to vector<128x32xf32>
      %55 = arith.mulf %47, %54 : vector<128x32xf32>
      %c0_26 = arith.constant 0 : index
      %c0_27 = arith.constant 0 : index
      %56 = vector.load %arg7[%c0_26, %c0_27] : memref<128x32xf32, #tpu.memory_space<vmem>>, vector<128x32xf32>
      tpu.vector_store %arg7[%c0_26, %c0_27], %55 {strides = array<i32>} : memref<128x32xf32, #tpu.memory_space<vmem>>, vector<128x32xf32>,
    } else {
    }
    %c0 = arith.constant 0 : index
    %c0_1 = arith.constant 0 : index
    %3 = vector.load %arg5[%c0, %c0_1] : memref<128x32xf32, #tpu.memory_space<vmem>>, vector<128x32xf32>
    %4 = arith.mulf %3, %3 : vector<128x32xf32>
    %cst = arith.constant dense<0.000000e+00> : vector<128xf32>
    %5 = vector.multi_reduction <add>, %4, %cst [1] : vector<128x32xf32> to vector<128xf32>
    %6 = vector.shape_cast %5 : vector<128xf32> to vector<128x1xf32>
    %cst_2 = arith.constant 1.000000e-16 : f32
    %7 = vector.broadcast %cst_2 : f32 to vector<128x1xf32>
    %8 = arith.maximumf %6, %7 : vector<128x1xf32>
    %9 = math.rsqrt %8 : vector<128x1xf32>
    %10 = vector.broadcast %9 : vector<128x1xf32> to vector<128x32xf32>
    %11 = arith.mulf %3, %10 : vector<128x32xf32>
    %c0_3 = arith.constant 0 : index
    %c0_4 = arith.constant 0 : index
    %12 = vector.load %arg7[%c0_3, %c0_4] : memref<128x32xf32, #tpu.memory_space<vmem>>, vector<128x32xf32>
    %cst_5 = arith.constant dense<0.000000e+00> : vector<128x128xf32>
    %13 = tpu.matmul %12, %11, %cst_5 {dimension_numbers = #tpu.dot_dimension_numbers<[1], [1], [0], [0], [0, 0, 1, 0], [], []>} : vector<128x32xf32>, vector<128x32xf32>, vector<128x128xf32> -> vector<128x128xf32>
    %c0_6 = arith.constant 0 : index
    %c0_7 = arith.constant 0 : index
    %14 = vector.load %arg2[%c0_6, %c0_7] : memref<128x1xi32, #tpu.memory_space<vmem>>, vector<128x1xi32>
    %c0_8 = arith.constant 0 : index
    %c0_9 = arith.constant 0 : index
    %15 = vector.load %arg3[%c0_8, %c0_9] : memref<1x128xi32, #tpu.memory_space<vmem>>, vector<1x128xi32>
    %16 = vector.broadcast %14 : vector<128x1xi32> to vector<128x128xi32>
    %17 = vector.broadcast %15 : vector<1x128xi32> to vector<128x128xi32>
    %18 = arith.cmpi ne, %16, %17 : vector<128x128xi32>
    %c-2147483648_i32 = arith.constant -2147483648 : i32
    %19 = vector.broadcast %c-2147483648_i32 : i32 to vector<128x1xi32>
    %20 = arith.cmpi ne, %14, %19 : vector<128x1xi32>
    %c-2147483648_i32_10 = arith.constant -2147483648 : i32
    %21 = vector.broadcast %c-2147483648_i32_10 : i32 to vector<1x128xi32>
    %22 = arith.cmpi ne, %15, %21 : vector<1x128xi32>
    %23 = vector.broadcast %20 : vector<128x1xi1> to vector<128x128xi1>
    %24 = vector.broadcast %22 : vector<1x128xi1> to vector<128x128xi1>
    %25 = arith.andi %23, %24 : vector<128x128xi1>
    %26 = arith.andi %18, %25 : vector<128x128xi1>
    %cst_11 = arith.constant 3.000000e-01 : f32
    %27 = vector.broadcast %cst_11 : f32 to vector<128x128xf32>
    %28 = arith.subf %13, %27 : vector<128x128xf32>
    %cst_12 = arith.constant 0.000000e+00 : f32
    %29 = vector.broadcast %cst_12 : f32 to vector<128x128xf32>
    %30 = arith.maximumf %28, %29 : vector<128x128xf32>
    %c0_13 = arith.constant 0 : index
    %31 = memref.load %arg8[%c0_13] : memref<1xf32, #tpu.memory_space<smem>>
    %cst_14 = arith.constant 0.000000e+00 : f32
    %32 = vector.broadcast %cst_14 : f32 to vector<128x128xf32>
    %33 = arith.select %26, %30, %32 : vector<128x128xi1>, vector<128x128xf32>
    %34 = vector.shape_cast %33 : vector<128x128xf32> to vector<1x128x128xf32>
    %cst_15 = arith.constant dense<0.000000e+00> : vector<1xf32>
    %35 = vector.multi_reduction <add>, %34, %cst_15 [1, 2] : vector<1x128x128xf32> to vector<1xf32>
    %36 = vector.shape_cast %35 : vector<1xf32> to vector<1x1x1xf32>
    %37 = vector.extract %36[0, 0, 0] : f32 from vector<1x1x1xf32>
    %38 = arith.addf %31, %37 : f32
    %c0_16 = arith.constant 0 : index
    %39 = memref.load %arg8[%c0_16] : memref<1xf32, #tpu.memory_space<smem>>
    memref.store %38, %arg8[%c0_16] : memref<1xf32, #tpu.memory_space<smem>>
    %40 = arith.cmpi eq, %arg0, %arg1 : i32
    %41 = arith.extui %40 : i1 to i32
    %c0_i32_17 = arith.constant 0 : i32
    %42 = arith.cmpi ne, %41, %c0_i32_17 : i32
    scf.if %42 {
      %46 = tpu.iota {dimensions = array<i32: 0>} : vector<128x128xi32>
      %47 = tpu.iota {dimensions = array<i32: 1>} : vector<128x128xi32>
      %48 = arith.cmpi eq, %46, %47 : vector<128x128xi32>
      %c128_i32 = arith.constant 128 : i32
      %49 = arith.muli %arg0, %c128_i32 : i32
      %50 = vector.broadcast %49 : i32 to vector<128x128xi32>
      %51 = arith.addi %50, %46 : vector<128x128xi32>
      %c8_i32 = arith.constant 8 : i32
      %52 = vector.broadcast %c8_i32 : i32 to vector<128x128xi32>
      %53 = arith.cmpi slt, %51, %52 : vector<128x128xi32>
      %54 = arith.andi %48, %53 : vector<128x128xi1>
      %c0_20 = arith.constant 0 : index
      %55 = memref.load %arg8[%c0_20] : memref<1xf32, #tpu.memory_space<smem>>
      %cst_21 = arith.constant 1.000000e+00 : f32
      %56 = vector.broadcast %cst_21 : f32 to vector<128x128xf32>
      %57 = arith.subf %56, %13 : vector<128x128xf32>
      %cst_22 = arith.constant 0.000000e+00 : f32
      %58 = vector.broadcast %cst_22 : f32 to vector<128x128xf32>
      %59 = arith.select %54, %57, %58 : vector<128x128xi1>, vector<128x128xf32>
      %60 = vector.shape_cast %59 : vector<128x128xf32> to vector<1x128x128xf32>
      %cst_23 = arith.constant dense<0.000000e+00> : vector<1xf32>
      %61 = vector.multi_reduction <add>, %60, %cst_23 [1, 2] : vector<1x128x128xf32> to vector<1xf32>
      %62 = vector.shape_cast %61 : vector<1xf32> to vector<1x1x1xf32>
      %63 = vector.extract %62[0, 0, 0] : f32 from vector<1x1x1xf32>
      %64 = arith.addf %55, %63 : f32
      %c0_24 = arith.constant 0 : index
      %65 = memref.load %arg8[%c0_24] : memref<1xf32, #tpu.memory_space<smem>>
      memref.store %64, %arg8[%c0_24] : memref<1xf32, #tpu.memory_space<smem>>
    } else {
    }
    %c0_i32_18 = arith.constant 0 : i32
    %43 = arith.cmpi eq, %arg1, %c0_i32_18 : i32
    %44 = arith.extui %43 : i1 to i32
    %c0_i32_19 = arith.constant 0 : i32
    %45 = arith.cmpi ne, %44, %c0_i32_19 : i32
    scf.if %45 {
      %46 = tpu.iota {dimensions = array<i32: 2>} : vector<1x1x128xi32>
      %c0_i32_20 = arith.constant 0 : i32
      %47 = vector.broadcast %c0_i32_20 : i32 to vector<1x1x128xi32>
      %48 = arith.cmpi eq, %46, %47 : vector<1x1x128xi32>
      %c0_21 = arith.constant 0 : index
      %49 = memref.load %arg8[%c0_21] : memref<1xf32, #tpu.memory_space<smem>>
      %cst_22 = arith.constant 0.000000e+00 : f32
      %50 = vector.broadcast %49 : f32 to vector<1x1x128xf32>
      %51 = vector.broadcast %cst_22 : f32 to vector<1x1x128xf32>
      %52 = arith.select %48, %50, %51 : vector<1x1x128xi1>, vector<1x1x128xf32>
      %c0_23 = arith.constant 0 : index
      %c0_24 = arith.constant 0 : index
      %c0_25 = arith.constant 0 : index
      %53 = vector.load %arg6[%c0_23, %c0_24, %c0_25] : memref<1x1x128xf32, #tpu.memory_space<vmem>>, vector<1x1x128xf32>
      tpu.vector_store %arg6[%c0_23, %c0_24, %c0_25], %52 {strides = array<i32>} : memref<1x1x128xf32, #tpu.memory_space<vmem>>, vector<1x1x128xf32>,
    } else {
    }
    return
  }
  func.func @transform_0(%arg0: i32, %arg1: i32) -> (i32, i32) {
    %c0_i32 = arith.constant 0 : i32
    %c0_i32_0 = arith.constant 0 : i32
    return %arg0, %c0_i32 : i32, i32
  }
  func.func @transform_1(%arg0: i32, %arg1: i32) -> (i32, i32) {
    %c0_i32 = arith.constant 0 : i32
    %c0_i32_0 = arith.constant 0 : i32
    return %c0_i32, %arg1 : i32, i32
  }
  func.func @transform_2(%arg0: i32, %arg1: i32) -> (i32, i32) {
    %c0_i32 = arith.constant 0 : i32
    %c0_i32_0 = arith.constant 0 : i32
    return %arg0, %c0_i32 : i32, i32
  }
  func.func @transform_3(%arg0: i32, %arg1: i32) -> (i32, i32) {
    %c0_i32 = arith.constant 0 : i32
    %c0_i32_0 = arith.constant 0 : i32
    return %arg1, %c0_i32 : i32, i32
  }
  func.func @transform_4(%arg0: i32, %arg1: i32) -> (i32, i32, i32) {
    %c0_i32 = arith.constant 0 : i32
    %c0_i32_0 = arith.constant 0 : i32
    %c0_i32_1 = arith.constant 0 : i32
    return %arg0, %c0_i32, %c0_i32_0 : i32, i32, i32
  }
}

</mosaic_0001>

<llo_original>
// kernel: contrastive_loss.1
$region0: #{contrastive_loss.1}
  #allocation0 [shape = 'u32[]', space=smem, size = 0x4, offset = 0x4, fixed_abs, tag = 'smem constant byte address 0x4 - core index']
  #allocation1 [shape = 'u32[72,128]{1,0:T(1,128)}', space=vmem, size = 0x9000, scoped, tag = 'internal scratch']
  #allocation2 [shape = 'f32[128,32]{1,0:T(8,128)}', space=vmem, size = 0x10000, scoped, tag = 'scratch operand']
  #allocation3 [shape = 'f32[1]{0:T(128)}', space=smem, size = 0x200, scoped, tag = 'scratch operand']
  %s0 = inlined_call_operand.vmem [shape: s32[128,1], index: 0, kind: input, shape index: {}]
  %s1 = inlined_call_operand.vmem [shape: s32[1,128], index: 1, kind: input, shape index: {}]
  %s2 = inlined_call_operand.vmem [shape: f32[128,32], index: 2, kind: input, shape index: {}]
  %s3 = inlined_call_operand.vmem [shape: f32[128,32], index: 3, kind: input, shape index: {}]
  %s4 = inlined_call_operand.vmem [shape: f32[1,1,128], index: 4, kind: output, shape index: {}]
  %s5 = sld [smem:[#allocation0]]
  $region38: #{contrastive_loss.1} parent=0
    _
  %s7 = ssub.s32 1, %s5
  %s8 = scalar_select 0, %s7, %s5
  // Predicated region
  $region2: #{contrastive_loss.1} parent=0 // pred_check
    _
  $region3: #{contrastive_loss.1} parent=0 // pred_check_branch
    %10 = sbr.rel (0) target = $region5
  $region4: #{contrastive_loss.1} parent=0 // pred_region
    _
  $region5: #{contrastive_loss.1} parent=0 // pred_fallthru
    _
  // Predicated region
  $region6: #{contrastive_loss.1} parent=0 // pred_check
    _
  $region7: #{contrastive_loss.1} parent=0 // pred_check_branch
    %12 = sbr.rel (0) target = $region9
  $region8: #{contrastive_loss.1} parent=0 // pred_region
    _
  $region9: #{contrastive_loss.1} parent=0 // pred_fallthru
    _
  // Predicated region
  $region10: #{contrastive_loss.1} parent=0 // pred_check
    _
  $region11: #{contrastive_loss.1} parent=0 // pred_check_branch
    %14 = sbr.rel (0) target = $region13
  $region12: #{contrastive_loss.1} parent=0 // pred_region
    _
  $region13: #{contrastive_loss.1} parent=0 // pred_fallthru
    _
  // Predicated region
  $region14: #{contrastive_loss.1} parent=0 // pred_check
    _
  $region15: #{contrastive_loss.1} parent=0 // pred_check_branch
    %16 = sbr.rel (0) target = $region17
  $region16: #{contrastive_loss.1} parent=0 // pred_region
    _
  $region17: #{contrastive_loss.1} parent=0 // pred_fallthru
    _
  %p17 = scmp.eq.s32.totalorder 0, 0
  // Predicated region
  $region18: #{contrastive_loss.1} parent=0 // pred_check
    %p18 = pneg %p17
  $region19: #{contrastive_loss.1} parent=0 // pred_check_branch
    %20 = sbr.rel (%p18) target = $region21
  $region20: #{contrastive_loss.1} parent=0 // pred_region
    %s21 = scalar_lea.smem [#allocation3], 0
    %22 = sst [smem:[%s21]] 0.0
    %v23 = vld [vmem:[%s2] sm:$0xff]
    %v24 = vld [vmem:[%s2 + $0x8] sm:$0xff]
    %v25 = vld [vmem:[%s2 + $0x10] sm:$0xff]
    %v26 = vld [vmem:[%s2 + $0x18] sm:$0xff]
    %v27 = vld [vmem:[%s2 + $0x20] sm:$0xff]
    %v28 = vld [vmem:[%s2 + $0x28] sm:$0xff]
    %v29 = vld [vmem:[%s2 + $0x30] sm:$0xff]
    %v30 = vld [vmem:[%s2 + $0x38] sm:$0xff]
    %v31 = vld [vmem:[%s2 + $0x40] sm:$0xff]
    %v32 = vld [vmem:[%s2 + $0x48] sm:$0xff]
    %v33 = vld [vmem:[%s2 + $0x50] sm:$0xff]
    %v34 = vld [vmem:[%s2 + $0x58] sm:$0xff]
    %v35 = vld [vmem:[%s2 + $0x60] sm:$0xff]
    %v36 = vld [vmem:[%s2 + $0x68] sm:$0xff]
    %v37 = vld [vmem:[%s2 + $0x70] sm:$0xff]
    %v38 = vld [vmem:[%s2 + $0x78] sm:$0xff]
    %v39 = vmul.f32 %v23, %v23
    %v40 = vmul.f32 %v24, %v24
    %v41 = vmul.f32 %v25, %v25
    %v42 = vmul.f32 %v26, %v26
    %v43 = vmul.f32 %v27, %v27
    %v44 = vmul.f32 %v28, %v28
    %v45 = vmul.f32 %v29, %v29
    %v46 = vmul.f32 %v30, %v30
    %v47 = vmul.f32 %v31, %v31
    %v48 = vmul.f32 %v32, %v32
    %v49 = vmul.f32 %v33, %v33
    %v50 = vmul.f32 %v34, %v34
    %v51 = vmul.f32 %v35, %v35
    %v52 = vmul.f32 %v36, %v36
    %v53 = vmul.f32 %v37, %v37
    %v54 = vmul.f32 %v38, %v38
    %vm55 = vcmask 261120
    %v56 = vsel %vm55, %v39, 0.0
    %57 = vadd.xlane.f32.xlu0 %v56
    %v58 = vpop.xlane.xlu0 %57
    %v59 = vsel %vm55, %v40, 0.0
    %60 = vadd.xlane.f32.xlu0 %v59
    %v61 = vpop.xlane.xlu0 %60
    %v62 = vsel %vm55, %v41, 0.0
    %63 = vadd.xlane.f32.xlu0 %v62
    %v64 = vpop.xlane.xlu0 %63
    %v65 = vsel %vm55, %v42, 0.0
    %66 = vadd.xlane.f32.xlu0 %v65
    %v67 = vpop.xlane.xlu0 %66
    %v68 = vsel %vm55, %v43, 0.0
    %69 = vadd.xlane.f32.xlu0 %v68
    %v70 = vpop.xlane.xlu0 %69
    %v71 = vsel %vm55, %v44, 0.0
    %72 = vadd.xlane.f32.xlu0 %v71
    %v73 = vpop.xlane.xlu0 %72
    %v74 = vsel %vm55, %v45, 0.0
    %75 = vadd.xlane.f32.xlu0 %v74
    %v76 = vpop.xlane.xlu0 %75
    %v77 = vsel %vm55, %v46, 0.0
    %78 = vadd.xlane.f32.xlu0 %v77
    %v79 = vpop.xlane.xlu0 %78
    %v80 = vsel %vm55, %v47, 0.0
    %81 = vadd.xlane.f32.xlu0 %v80
    %v82 = vpop.xlane.xlu0 %81
    %v83 = vsel %vm55, %v48, 0.0
    %84 = vadd.xlane.f32.xlu0 %v83
    %v85 = vpop.xlane.xlu0 %84
    %v86 = vsel %vm55, %v49, 0.0
    %87 = vadd.xlane.f32.xlu0 %v86
    %v88 = vpop.xlane.xlu0 %87
    %v89 = vsel %vm55, %v50, 0.0
    %90 = vadd.xlane.f32.xlu0 %v89
    %v91 = vpop.xlane.xlu0 %90
    %v92 = vsel %vm55, %v51, 0.0
    %93 = vadd.xlane.f32.xlu0 %v92
    %v94 = vpop.xlane.xlu0 %93
    %v95 = vsel %vm55, %v52, 0.0
    %96 = vadd.xlane.f32.xlu0 %v95
    %v97 = vpop.xlane.xlu0 %96
    %v98 = vsel %vm55, %v53, 0.0
    %99 = vadd.xlane.f32.xlu0 %v98
    %v100 = vpop.xlane.xlu0 %99
    %v101 = vsel %vm55, %v54, 0.0
    %102 = vadd.xlane.f32.xlu0 %v101
    %v103 = vpop.xlane.xlu0 %102
    %v104 = vmax.f32 %v58, 1e-16
    %v105 = vmax.f32 %v61, 1e-16
    %v106 = vmax.f32 %v64, 1e-16
    %v107 = vmax.f32 %v67, 1e-16
    %v108 = vmax.f32 %v70, 1e-16
    %v109 = vmax.f32 %v73, 1e-16
    %v110 = vmax.f32 %v76, 1e-16
    %v111 = vmax.f32 %v79, 1e-16
    %v112 = vmax.f32 %v82, 1e-16
    %v113 = vmax.f32 %v85, 1e-16
    %v114 = vmax.f32 %v88, 1e-16
    %v115 = vmax.f32 %v91, 1e-16
    %v116 = vmax.f32 %v94, 1e-16
    %v117 = vmax.f32 %v97, 1e-16
    %v118 = vmax.f32 %v100, 1e-16
    %v119 = vmax.f32 %v103, 1e-16
    %v120 = vrsqrt.pop %v104
    %v121 = vmul.f32 %v120, %v104
    %v122 = vmul.f32 %v121, %v120
    %v123 = vmul.f32 0.5, %v122
    %v124 = vsub.f32 1.5, %v123
    %v125 = vmul.f32 %v120, %v124
    %vm126 = vweird.f32 %v104
    %vm127 = vweird.f32 %v120
    %vm128 = vmor %vm126, %vm127
    %v129 = vsel %vm128, %v120, %v125
    %v130 = vrsqrt.pop %v105
    %v131 = vmul.f32 %v130, %v105
    %v132 = vmul.f32 %v131, %v130
    %v133 = vmul.f32 0.5, %v132
    %v134 = vsub.f32 1.5, %v133
    %v135 = vmul.f32 %v130, %v134
    %vm136 = vweird.f32 %v105
    %vm137 = vweird.f32 %v130
    %vm138 = vmor %vm136, %vm137
    %v139 = vsel %vm138, %v130, %v135
    %v140 = vrsqrt.pop %v106
    %v141 = vmul.f32 %v140, %v106
    %v142 = vmul.f32 %v141, %v140
    %v143 = vmul.f32 0.5, %v142
    %v144 = vsub.f32 1.5, %v143
    %v145 = vmul.f32 %v140, %v144
    %vm146 = vweird.f32 %v106
    %vm147 = vweird.f32 %v140
    %vm148 = vmor %vm146, %vm147
    %v149 = vsel %vm148, %v140, %v145
    %v150 = vrsqrt.pop %v107
    %v151 = vmul.f32 %v150, %v107
    %v152 = vmul.f32 %v151, %v150
    %v153 = vmul.f32 0.5, %v152
    %v154 = vsub.f32 1.5, %v153
    %v155 = vmul.f32 %v150, %v154
    %vm156 = vweird.f32 %v107
    %vm157 = vweird.f32 %v150
    %vm158 = vmor %vm156, %vm157
    %v159 = vsel %vm158, %v150, %v155
    %v160 = vrsqrt.pop %v108
    %v161 = vmul.f32 %v160, %v108
    %v162 = vmul.f32 %v161, %v160
    %v163 = vmul.f32 0.5, %v162
    %v164 = vsub.f32 1.5, %v163
    %v165 = vmul.f32 %v160, %v164
    %vm166 = vweird.f32 %v108
    %vm167 = vweird.f32 %v160
    %vm168 = vmor %vm166, %vm167
    %v169 = vsel %vm168, %v160, %v165
    %v170 = vrsqrt.pop %v109
    %v171 = vmul.f32 %v170, %v109
    %v172 = vmul.f32 %v171, %v170
    %v173 = vmul.f32 0.5, %v172
    %v174 = vsub.f32 1.5, %v173
    %v175 = vmul.f32 %v170, %v174
    %vm176 = vweird.f32 %v109
    %vm177 = vweird.f32 %v170
    %vm178 = vmor %vm176, %vm177
    %v179 = vsel %vm178, %v170, %v175
    %v180 = vrsqrt.pop %v110
    %v181 = vmul.f32 %v180, %v110
    %v182 = vmul.f32 %v181, %v180
    %v183 = vmul.f32 0.5, %v182
    %v184 = vsub.f32 1.5, %v183
    %v185 = vmul.f32 %v180, %v184
    %vm186 = vweird.f32 %v110
    %vm187 = vweird.f32 %v180
    %vm188 = vmor %vm186, %vm187
    %v189 = vsel %vm188, %v180, %v185
    %v190 = vrsqrt.pop %v111
    %v191 = vmul.f32 %v190, %v111
    %v192 = vmul.f32 %v191, %v190
    %v193 = vmul.f32 0.5, %v192
    %v194 = vsub.f32 1.5, %v193
    %v195 = vmul.f32 %v190, %v194
    %vm196 = vweird.f32 %v111
    %vm197 = vweird.f32 %v190
    %vm198 = vmor %vm196, %vm197
    %v199 = vsel %vm198, %v190, %v195
    %v200 = vrsqrt.pop %v112
    %v201 = vmul.f32 %v200, %v112
    %v202 = vmul.f32 %v201, %v200
    %v203 = vmul.f32 0.5, %v202
    %v204 = vsub.f32 1.5, %v203
    %v205 = vmul.f32 %v200, %v204
    %vm206 = vweird.f32 %v112
    %vm207 = vweird.f32 %v200
    %vm208 = vmor %vm206, %vm207
    %v209 = vsel %vm208, %v200, %v205
    %v210 = vrsqrt.pop %v113
    %v211 = vmul.f32 %v210, %v113
    %v212 = vmul.f32 %v211, %v210
    %v213 = vmul.f32 0.5, %v212
    %v214 = vsub.f32 1.5, %v213
    %v215 = vmul.f32 %v210, %v214
    %vm216 = vweird.f32 %v113
    %vm217 = vweird.f32 %v210
    %vm218 = vmor %vm216, %vm217
    %v219 = vsel %vm218, %v210, %v215
    %v220 = vrsqrt.pop %v114
    %v221 = vmul.f32 %v220, %v114
    %v222 = vmul.f32 %v221, %v220
    %v223 = vmul.f32 0.5, %v222
    %v224 = vsub.f32 1.5, %v223
    %v225 = vmul.f32 %v220, %v224
    %vm226 = vweird.f32 %v114
    %vm227 = vweird.f32 %v220
    %vm228 = vmor %vm226, %vm227
    %v229 = vsel %vm228, %v220, %v225
    %v230 = vrsqrt.pop %v115
    %v231 = vmul.f32 %v230, %v115
    %v232 = vmul.f32 %v231, %v230
    %v233 = vmul.f32 0.5, %v232
    %v234 = vsub.f32 1.5, %v233
    %v235 = vmul.f32 %v230, %v234
    %vm236 = vweird.f32 %v115
    %vm237 = vweird.f32 %v230
    %vm238 = vmor %vm236, %vm237
    %v239 = vsel %vm238, %v230, %v235
    %v240 = vrsqrt.pop %v116
    %v241 = vmul.f32 %v240, %v116
    %v242 = vmul.f32 %v241, %v240
    %v243 = vmul.f32 0.5, %v242
    %v244 = vsub.f32 1.5, %v243
    %v245 = vmul.f32 %v240, %v244
    %vm246 = vweird.f32 %v116
    %vm247 = vweird.f32 %v240
    %vm248 = vmor %vm246, %vm247
    %v249 = vsel %vm248, %v240, %v245
    %v250 = vrsqrt.pop %v117
    %v251 = vmul.f32 %v250, %v117
    %v252 = vmul.f32 %v251, %v250
    %v253 = vmul.f32 0.5, %v252
    %v254 = vsub.f32 1.5, %v253
    %v255 = vmul.f32 %v250, %v254
    %vm256 = vweird.f32 %v117
    %vm257 = vweird.f32 %v250
    %vm258 = vmor %vm256, %vm257
    %v259 = vsel %vm258, %v250, %v255
    %v260 = vrsqrt.pop %v118
    %v261 = vmul.f32 %v260, %v118
    %v262 = vmul.f32 %v261, %v260
    %v263 = vmul.f32 0.5, %v262
    %v264 = vsub.f32 1.5, %v263
    %v265 = vmul.f32 %v260, %v264
    %vm266 = vweird.f32 %v118
    %vm267 = vweird.f32 %v260
    %vm268 = vmor %vm266, %vm267
    %v269 = vsel %vm268, %v260, %v265
    %v270 = vrsqrt.pop %v119
    %v271 = vmul.f32 %v270, %v119
    %v272 = vmul.f32 %v271, %v270
    %v273 = vmul.f32 0.5, %v272
    %v274 = vsub.f32 1.5, %v273
    %v275 = vmul.f32 %v270, %v274
    %vm276 = vweird.f32 %v119
    %vm277 = vweird.f32 %v270
    %vm278 = vmor %vm276, %vm277
    %v279 = vsel %vm278, %v270, %v275
    %v280 = vmul.f32 %v23, %v129
    %v281 = vmul.f32 %v24, %v139
    %v282 = vmul.f32 %v25, %v149
    %v283 = vmul.f32 %v26, %v159
    %v284 = vmul.f32 %v27, %v169
    %v285 = vmul.f32 %v28, %v179
    %v286 = vmul.f32 %v29, %v189
    %v287 = vmul.f32 %v30, %v199
    %v288 = vmul.f32 %v31, %v209
    %v289 = vmul.f32 %v32, %v219
    %v290 = vmul.f32 %v33, %v229
    %v291 = vmul.f32 %v34, %v239
    %v292 = vmul.f32 %v35, %v249
    %v293 = vmul.f32 %v36, %v259
    %v294 = vmul.f32 %v37, %v269
    %v295 = vmul.f32 %v38, %v279
    %296 = vst.msk [vmem:[#allocation2] sm:$0xff] %vm55, %v280
    %297 = vst.msk [vmem:[#allocation2 + $0x8] sm:$0xff] %vm55, %v281
    %298 = vst.msk [vmem:[#allocation2 + $0x10] sm:$0xff] %vm55, %v282
    %299 = vst.msk [vmem:[#allocation2 + $0x18] sm:$0xff] %vm55, %v283
    %300 = vst.msk [vmem:[#allocation2 + $0x20] sm:$0xff] %vm55, %v284
    %301 = vst.msk [vmem:[#allocation2 + $0x28] sm:$0xff] %vm55, %v285
    %302 = vst.msk [vmem:[#allocation2 + $0x30] sm:$0xff] %vm55, %v286
    %303 = vst.msk [vmem:[#allocation2 + $0x38] sm:$0xff] %vm55, %v287
    %304 = vst.msk [vmem:[#allocation2 + $0x40] sm:$0xff] %vm55, %v288
    %305 = vst.msk [vmem:[#allocation2 + $0x48] sm:$0xff] %vm55, %v289
    %306 = vst.msk [vmem:[#allocation2 + $0x50] sm:$0xff] %vm55, %v290
    %307 = vst.msk [vmem:[#allocation2 + $0x58] sm:$0xff] %vm55, %v291
    %308 = vst.msk [vmem:[#allocation2 + $0x60] sm:$0xff] %vm55, %v292
    %309 = vst.msk [vmem:[#allocation2 + $0x68] sm:$0xff] %vm55, %v293
    %310 = vst.msk [vmem:[#allocation2 + $0x70] sm:$0xff] %vm55, %v294
    %311 = vst.msk [vmem:[#allocation2 + $0x78] sm:$0xff] %vm55, %v295
  $region21: #{contrastive_loss.1} parent=0 // pred_fallthru
    _
  %v312 = vld [vmem:[%s3] sm:$0xff]
  %v313 = vld [vmem:[%s3 + $0x8] sm:$0xff]
  %v314 = vld [vmem:[%s3 + $0x10] sm:$0xff]
  %v315 = vld [vmem:[%s3 + $0x18] sm:$0xff]
  %v316 = vld [vmem:[%s3 + $0x20] sm:$0xff]
  %v317 = vld [vmem:[%s3 + $0x28] sm:$0xff]
  %v318 = vld [vmem:[%s3 + $0x30] sm:$0xff]
  %v319 = vld [vmem:[%s3 + $0x38] sm:$0xff]
  %v320 = vld [vmem:[%s3 + $0x40] sm:$0xff]
  %v321 = vld [vmem:[%s3 + $0x48] sm:$0xff]
  %v322 = vld [vmem:[%s3 + $0x50] sm:$0xff]
  %v323 = vld [vmem:[%s3 + $0x58] sm:$0xff]
  %v324 = vld [vmem:[%s3 + $0x60] sm:$0xff]
  %v325 = vld [vmem:[%s3 + $0x68] sm:$0xff]
  %v326 = vld [vmem:[%s3 + $0x70] sm:$0xff]
  %v327 = vld [vmem:[%s3 + $0x78] sm:$0xff]
  %v328 = vmul.f32 %v312, %v312
  %v329 = vmul.f32 %v313, %v313
  %v330 = vmul.f32 %v314, %v314
  %v331 = vmul.f32 %v315, %v315
  %v332 = vmul.f32 %v316, %v316
  %v333 = vmul.f32 %v317, %v317
  %v334 = vmul.f32 %v318, %v318
  %v335 = vmul.f32 %v319, %v319
  %v336 = vmul.f32 %v320, %v320
  %v337 = vmul.f32 %v321, %v321
  %v338 = vmul.f32 %v322, %v322
  %v339 = vmul.f32 %v323, %v323
  %v340 = vmul.f32 %v324, %v324
  %v341 = vmul.f32 %v325, %v325
  %v342 = vmul.f32 %v326, %v326
  %v343 = vmul.f32 %v327, %v327
  %vm344 = vcmask 261120
  %v345 = vsel %vm344, %v328, 0.0
  %346 = vadd.xlane.f32.xlu0 %v345
  %v347 = vpop.xlane.xlu0 %346
  %v348 = vsel %vm344, %v329, 0.0
  %349 = vadd.xlane.f32.xlu0 %v348
  %v350 = vpop.xlane.xlu0 %349
  %v351 = vsel %vm344, %v330, 0.0
  %352 = vadd.xlane.f32.xlu0 %v351
  %v353 = vpop.xlane.xlu0 %352
  %v354 = vsel %vm344, %v331, 0.0
  %355 = vadd.xlane.f32.xlu0 %v354
  %v356 = vpop.xlane.xlu0 %355
  %v357 = vsel %vm344, %v332, 0.0
  %358 = vadd.xlane.f32.xlu0 %v357
  %v359 = vpop.xlane.xlu0 %358
  %v360 = vsel %vm344, %v333, 0.0
  %361 = vadd.xlane.f32.xlu0 %v360
  %v362 = vpop.xlane.xlu0 %361
  %v363 = vsel %vm344, %v334, 0.0
  %364 = vadd.xlane.f32.xlu0 %v363
  %v365 = vpop.xlane.xlu0 %364
  %v366 = vsel %vm344, %v335, 0.0
  %367 = vadd.xlane.f32.xlu0 %v366
  %v368 = vpop.xlane.xlu0 %367
  %v369 = vsel %vm344, %v336, 0.0
  %370 = vadd.xlane.f32.xlu0 %v369
  %v371 = vpop.xlane.xlu0 %370
  %v372 = vsel %vm344, %v337, 0.0
  %373 = vadd.xlane.f32.xlu0 %v372
  %v374 = vpop.xlane.xlu0 %373
  %v375 = vsel %vm344, %v338, 0.0
  %376 = vadd.xlane.f32.xlu0 %v375
  %v377 = vpop.xlane.xlu0 %376
  %v378 = vsel %vm344, %v339, 0.0
  %379 = vadd.xlane.f32.xlu0 %v378
  %v380 = vpop.xlane.xlu0 %379
  %v381 = vsel %vm344, %v340, 0.0
  %382 = vadd.xlane.f32.xlu0 %v381
  %v383 = vpop.xlane.xlu0 %382
  %v384 = vsel %vm344, %v341, 0.0
  %385 = vadd.xlane.f32.xlu0 %v384
  %v386 = vpop.xlane.xlu0 %385
  %v387 = vsel %vm344, %v342, 0.0
  %388 = vadd.xlane.f32.xlu0 %v387
  %v389 = vpop.xlane.xlu0 %388
  %v390 = vsel %vm344, %v343, 0.0
  %391 = vadd.xlane.f32.xlu0 %v390
  %v392 = vpop.xlane.xlu0 %391
  %v393 = vmax.f32 %v347, 1e-16
  %v394 = vmax.f32 %v350, 1e-16
  %v395 = vmax.f32 %v353, 1e-16
  %v396 = vmax.f32 %v356, 1e-16
  %v397 = vmax.f32 %v359, 1e-16
  %v398 = vmax.f32 %v362, 1e-16
  %v399 = vmax.f32 %v365, 1e-16
  %v400 = vmax.f32 %v368, 1e-16
  %v401 = vmax.f32 %v371, 1e-16
  %v402 = vmax.f32 %v374, 1e-16
  %v403 = vmax.f32 %v377, 1e-16
  %v404 = vmax.f32 %v380, 1e-16
  %v405 = vmax.f32 %v383, 1e-16
  %v406 = vmax.f32 %v386, 1e-16
  %v407 = vmax.f32 %v389, 1e-16
  %v408 = vmax.f32 %v392, 1e-16
  %v409 = vrsqrt.pop %v393
  %v410 = vmul.f32 %v409, %v393
  %v411 = vmul.f32 %v410, %v409
  %v412 = vmul.f32 0.5, %v411
  %v413 = vsub.f32 1.5, %v412
  %v414 = vmul.f32 %v409, %v413
  %vm415 = vweird.f32 %v393
  %vm416 = vweird.f32 %v409
  %vm417 = vmor %vm415, %vm416
  %v418 = vsel %vm417, %v409, %v414
  %v419 = vrsqrt.pop %v394
  %v420 = vmul.f32 %v419, %v394
  %v421 = vmul.f32 %v420, %v419
  %v422 = vmul.f32 0.5, %v421
  %v423 = vsub.f32 1.5, %v422
  %v424 = vmul.f32 %v419, %v423
  %vm425 = vweird.f32 %v394
  %vm426 = vweird.f32 %v419
  %vm427 = vmor %vm425, %vm426
  %v428 = vsel %vm427, %v419, %v424
  %v429 = vrsqrt.pop %v395
  %v430 = vmul.f32 %v429, %v395
  %v431 = vmul.f32 %v430, %v429
  %v432 = vmul.f32 0.5, %v431
  %v433 = vsub.f32 1.5, %v432
  %v434 = vmul.f32 %v429, %v433
  %vm435 = vweird.f32 %v395
  %vm436 = vweird.f32 %v429
  %vm437 = vmor %vm435, %vm436
  %v438 = vsel %vm437, %v429, %v434
  %v439 = vrsqrt.pop %v396
  %v440 = vmul.f32 %v439, %v396
  %v441 = vmul.f32 %v440, %v439
  %v442 = vmul.f32 0.5, %v441
  %v443 = vsub.f32 1.5, %v442
  %v444 = vmul.f32 %v439, %v443
  %vm445 = vweird.f32 %v396
  %vm446 = vweird.f32 %v439
  %vm447 = vmor %vm445, %vm446
  %v448 = vsel %vm447, %v439, %v444
  %v449 = vrsqrt.pop %v397
  %v450 = vmul.f32 %v449, %v397
  %v451 = vmul.f32 %v450, %v449
  %v452 = vmul.f32 0.5, %v451
  %v453 = vsub.f32 1.5, %v452
  %v454 = vmul.f32 %v449, %v453
  %vm455 = vweird.f32 %v397
  %vm456 = vweird.f32 %v449
  %vm457 = vmor %vm455, %vm456
  %v458 = vsel %vm457, %v449, %v454
  %v459 = vrsqrt.pop %v398
  %v460 = vmul.f32 %v459, %v398
  %v461 = vmul.f32 %v460, %v459
  %v462 = vmul.f32 0.5, %v461
  %v463 = vsub.f32 1.5, %v462
  %v464 = vmul.f32 %v459, %v463
  %vm465 = vweird.f32 %v398
  %vm466 = vweird.f32 %v459
  %vm467 = vmor %vm465, %vm466
  %v468 = vsel %vm467, %v459, %v464
  %v469 = vrsqrt.pop %v399
  %v470 = vmul.f32 %v469, %v399
  %v471 = vmul.f32 %v470, %v469
  %v472 = vmul.f32 0.5, %v471
  %v473 = vsub.f32 1.5, %v472
  %v474 = vmul.f32 %v469, %v473
  %vm475 = vweird.f32 %v399
  %vm476 = vweird.f32 %v469
  %vm477 = vmor %vm475, %vm476
  %v478 = vsel %vm477, %v469, %v474
  %v479 = vrsqrt.pop %v400
  %v480 = vmul.f32 %v479, %v400
  %v481 = vmul.f32 %v480, %v479
  %v482 = vmul.f32 0.5, %v481
  %v483 = vsub.f32 1.5, %v482
  %v484 = vmul.f32 %v479, %v483
  %vm485 = vweird.f32 %v400
  %vm486 = vweird.f32 %v479
  %vm487 = vmor %vm485, %vm486
  %v488 = vsel %vm487, %v479, %v484
  %v489 = vrsqrt.pop %v401
  %v490 = vmul.f32 %v489, %v401
  %v491 = vmul.f32 %v490, %v489
  %v492 = vmul.f32 0.5, %v491
  %v493 = vsub.f32 1.5, %v492
  %v494 = vmul.f32 %v489, %v493
  %vm495 = vweird.f32 %v401
  %vm496 = vweird.f32 %v489
  %vm497 = vmor %vm495, %vm496
  %v498 = vsel %vm497, %v489, %v494
  %v499 = vrsqrt.pop %v402
  %v500 = vmul.f32 %v499, %v402
  %v501 = vmul.f32 %v500, %v499
  %v502 = vmul.f32 0.5, %v501
  %v503 = vsub.f32 1.5, %v502
  %v504 = vmul.f32 %v499, %v503
  %vm505 = vweird.f32 %v402
  %vm506 = vweird.f32 %v499
  %vm507 = vmor %vm505, %vm506
  %v508 = vsel %vm507, %v499, %v504
  %v509 = vrsqrt.pop %v403
  %v510 = vmul.f32 %v509, %v403
  %v511 = vmul.f32 %v510, %v509
  %v512 = vmul.f32 0.5, %v511
  %v513 = vsub.f32 1.5, %v512
  %v514 = vmul.f32 %v509, %v513
  %vm515 = vweird.f32 %v403
  %vm516 = vweird.f32 %v509
  %vm517 = vmor %vm515, %vm516
  %v518 = vsel %vm517, %v509, %v514
  %v519 = vrsqrt.pop %v404
  %v520 = vmul.f32 %v519, %v404
  %v521 = vmul.f32 %v520, %v519
  %v522 = vmul.f32 0.5, %v521
  %v523 = vsub.f32 1.5, %v522
  %v524 = vmul.f32 %v519, %v523
  %vm525 = vweird.f32 %v404
  %vm526 = vweird.f32 %v519
  %vm527 = vmor %vm525, %vm526
  %v528 = vsel %vm527, %v519, %v524
  %v529 = vrsqrt.pop %v405
  %v530 = vmul.f32 %v529, %v405
  %v531 = vmul.f32 %v530, %v529
  %v532 = vmul.f32 0.5, %v531
  %v533 = vsub.f32 1.5, %v532
  %v534 = vmul.f32 %v529, %v533
  %vm535 = vweird.f32 %v405
  %vm536 = vweird.f32 %v529
  %vm537 = vmor %vm535, %vm536
  %v538 = vsel %vm537, %v529, %v534
  %v539 = vrsqrt.pop %v406
  %v540 = vmul.f32 %v539, %v406
  %v541 = vmul.f32 %v540, %v539
  %v542 = vmul.f32 0.5, %v541
  %v543 = vsub.f32 1.5, %v542
  %v544 = vmul.f32 %v539, %v543
  %vm545 = vweird.f32 %v406
  %vm546 = vweird.f32 %v539
  %vm547 = vmor %vm545, %vm546
  %v548 = vsel %vm547, %v539, %v544
  %v549 = vrsqrt.pop %v407
  %v550 = vmul.f32 %v549, %v407
  %v551 = vmul.f32 %v550, %v549
  %v552 = vmul.f32 0.5, %v551
  %v553 = vsub.f32 1.5, %v552
  %v554 = vmul.f32 %v549, %v553
  %vm555 = vweird.f32 %v407
  %vm556 = vweird.f32 %v549
  %vm557 = vmor %vm555, %vm556
  %v558 = vsel %vm557, %v549, %v554
  %v559 = vrsqrt.pop %v408
  %v560 = vmul.f32 %v559, %v408
  %v561 = vmul.f32 %v560, %v559
  %v562 = vmul.f32 0.5, %v561
  %v563 = vsub.f32 1.5, %v562
  %v564 = vmul.f32 %v559, %v563
  %vm565 = vweird.f32 %v408
  %vm566 = vweird.f32 %v559
  %vm567 = vmor %vm565, %vm566
  %v568 = vsel %vm567, %v559, %v564
  %v569 = vmul.f32 %v312, %v418
  %v570 = vmul.f32 %v313, %v428
  %v571 = vmul.f32 %v314, %v438
  %v572 = vmul.f32 %v315, %v448
  %v573 = vmul.f32 %v316, %v458
  %v574 = vmul.f32 %v317, %v468
  %v575 = vmul.f32 %v318, %v478
  %v576 = vmul.f32 %v319, %v488
  %v577 = vmul.f32 %v320, %v498
  %v578 = vmul.f32 %v321, %v508
  %v579 = vmul.f32 %v322, %v518
  %v580 = vmul.f32 %v323, %v528
  %v581 = vmul.f32 %v324, %v538
  %v582 = vmul.f32 %v325, %v548
  %v583 = vmul.f32 %v326, %v558
  %v584 = vmul.f32 %v327, %v568
  %v585 = vld [vmem:[#allocation2] sm:$0xff]
  %v586 = vld [vmem:[#allocation2 + $0x8] sm:$0xff]
  %v587 = vld [vmem:[#allocation2 + $0x10] sm:$0xff]
  %v588 = vld [vmem:[#allocation2 + $0x18] sm:$0xff]
  %v589 = vld [vmem:[#allocation2 + $0x20] sm:$0xff]
  %v590 = vld [vmem:[#allocation2 + $0x28] sm:$0xff]
  %v591 = vld [vmem:[#allocation2 + $0x30] sm:$0xff]
  %v592 = vld [vmem:[#allocation2 + $0x38] sm:$0xff]
  %v593 = vld [vmem:[#allocation2 + $0x40] sm:$0xff]
  %v594 = vld [vmem:[#allocation2 + $0x48] sm:$0xff]
  %v595 = vld [vmem:[#allocation2 + $0x50] sm:$0xff]
  %v596 = vld [vmem:[#allocation2 + $0x58] sm:$0xff]
  %v597 = vld [vmem:[#allocation2 + $0x60] sm:$0xff]
  %v598 = vld [vmem:[#allocation2 + $0x68] sm:$0xff]
  %v599 = vld [vmem:[#allocation2 + $0x70] sm:$0xff]
  %v600 = vld [vmem:[#allocation2 + $0x78] sm:$0xff]
  %v602 = vsel %vm344, %v585, 0
  %v605 = vsel %vm344, %v586, 0
  %v608 = vsel %vm344, %v587, 0
  %v611 = vsel %vm344, %v588, 0
  %v614 = vsel %vm344, %v589, 0
  %v617 = vsel %vm344, %v590, 0
  %v620 = vsel %vm344, %v591, 0
  %v623 = vsel %vm344, %v592, 0
  %v626 = vsel %vm344, %v593, 0
  %v629 = vsel %vm344, %v594, 0
  %v632 = vsel %vm344, %v595, 0
  %v635 = vsel %vm344, %v596, 0
  %v638 = vsel %vm344, %v597, 0
  %v641 = vsel %vm344, %v598, 0
  %v644 = vsel %vm344, %v599, 0
  %v647 = vsel %vm344, %v600, 0
  %v650 = vsel %vm344, %v569, 0
  %v653 = vsel %vm344, %v570, 0
  %v656 = vsel %vm344, %v571, 0
  %v659 = vsel %vm344, %v572, 0
  %v662 = vsel %vm344, %v573, 0
  %v665 = vsel %vm344, %v574, 0
  %v668 = vsel %vm344, %v575, 0
  %v671 = vsel %vm344, %v576, 0
  %v674 = vsel %vm344, %v577, 0
  %v677 = vsel %vm344, %v578, 0
  %v680 = vsel %vm344, %v579, 0
  %v683 = vsel %vm344, %v580, 0
  %v686 = vsel %vm344, %v581, 0
  %v689 = vsel %vm344, %v582, 0
  %v692 = vsel %vm344, %v583, 0
  %v695 = vsel %vm344, %v584, 0
  %697 = vmatpush.xpose.msra.mxu0 %v695
  %698 = vmatpush.xpose.msra.mxu0 %v692
  %699 = vmatpush.xpose.msra.mxu0 %v689
  %700 = vmatpush.xpose.msra.mxu0 %v686
  %701 = vmatpush.xpose.msra.mxu0 %v683
  %702 = vmatpush.xpose.msra.mxu0 %v680
  %703 = vmatpush.xpose.msra.mxu0 %v677
  %704 = vmatpush.xpose.msra.mxu0 %v674
  %705 = vmatpush.xpose.msra.mxu0 %v671
  %706 = vmatpush.xpose.msra.mxu0 %v668
  %707 = vmatpush.xpose.msra.mxu0 %v665
  %708 = vmatpush.xpose.msra.mxu0 %v662
  %709 = vmatpush.xpose.msra.mxu0 %v659
  %710 = vmatpush.xpose.msra.mxu0 %v656
  %711 = vmatpush.xpose.msra.mxu0 %v653
  %712 = vmatpush.xpose.msra.mxu0 %v650
  %713 = vmatmul.f32.gmra.mxu0 %v602
  %v714 = vpop.f32.mrf.mxu0
  %v715 = vadd.f32 0.0, %v714
  %716 = vmatmul.f32.gmra.mxu0 %v605
  %v717 = vpop.f32.mrf.mxu0
  %v718 = vadd.f32 0.0, %v717
  %719 = vmatmul.f32.gmra.mxu0 %v608
  %v720 = vpop.f32.mrf.mxu0
  %v721 = vadd.f32 0.0, %v720
  %722 = vmatmul.f32.gmra.mxu0 %v611
  %v723 = vpop.f32.mrf.mxu0
  %v724 = vadd.f32 0.0, %v723
  %725 = vmatmul.f32.gmra.mxu0 %v614
  %v726 = vpop.f32.mrf.mxu0
  %v727 = vadd.f32 0.0, %v726
  %728 = vmatmul.f32.gmra.mxu0 %v617
  %v729 = vpop.f32.mrf.mxu0
  %v730 = vadd.f32 0.0, %v729
  %731 = vmatmul.f32.gmra.mxu0 %v620
  %v732 = vpop.f32.mrf.mxu0
  %v733 = vadd.f32 0.0, %v732
  %734 = vmatmul.f32.gmra.mxu0 %v623
  %v735 = vpop.f32.mrf.mxu0
  %v736 = vadd.f32 0.0, %v735
  %737 = vmatmul.f32.gmra.mxu0 %v626
  %v738 = vpop.f32.mrf.mxu0
  %v739 = vadd.f32 0.0, %v738
  %740 = vmatmul.f32.gmra.mxu0 %v629
  %v741 = vpop.f32.mrf.mxu0
  %v742 = vadd.f32 0.0, %v741
  %743 = vmatmul.f32.gmra.mxu0 %v632
  %v744 = vpop.f32.mrf.mxu0
  %v745 = vadd.f32 0.0, %v744
  %746 = vmatmul.f32.gmra.mxu0 %v635
  %v747 = vpop.f32.mrf.mxu0
  %v748 = vadd.f32 0.0, %v747
  %749 = vmatmul.f32.gmra.mxu0 %v638
  %v750 = vpop.f32.mrf.mxu0
  %v751 = vadd.f32 0.0, %v750
  %752 = vmatmul.f32.gmra.mxu0 %v641
  %v753 = vpop.f32.mrf.mxu0
  %v754 = vadd.f32 0.0, %v753
  %755 = vmatmul.f32.gmra.mxu0 %v644
  %v756 = vpop.f32.mrf.mxu0
  %v757 = vadd.f32 0.0, %v756
  %758 = vmatmul.f32.gmra.mxu0 %v647
  %v759 = vpop.f32.mrf.mxu0
  %v760 = vadd.f32 0.0, %v759
  %761 = vdwg.mxu0
  %v762 = vld [vmem:[%s0] sm:$0xff]
  %v763 = vld [vmem:[%s0 + $0x8] sm:$0xff]
  %v764 = vld [vmem:[%s0 + $0x10] sm:$0xff]
  %v765 = vld [vmem:[%s0 + $0x18] sm:$0xff]
  %v766 = vld [vmem:[%s0 + $0x20] sm:$0xff]
  %v767 = vld [vmem:[%s0 + $0x28] sm:$0xff]
  %v768 = vld [vmem:[%s0 + $0x30] sm:$0xff]
  %v769 = vld [vmem:[%s0 + $0x38] sm:$0xff]
  %v770 = vld [vmem:[%s0 + $0x40] sm:$0xff]
  %v771 = vld [vmem:[%s0 + $0x48] sm:$0xff]
  %v772 = vld [vmem:[%s0 + $0x50] sm:$0xff]
  %v773 = vld [vmem:[%s0 + $0x58] sm:$0xff]
  %v774 = vld [vmem:[%s0 + $0x60] sm:$0xff]
  %v775 = vld [vmem:[%s0 + $0x68] sm:$0xff]
  %v776 = vld [vmem:[%s0 + $0x70] sm:$0xff]
  %v777 = vld [vmem:[%s0 + $0x78] sm:$0xff]
  %v778 = vld [vmem:[%s1] sm:$0x1]
  %779 = vset.pattern.permute.xlu0 0
  %780 = vperm.xlu0 %779, %v762
  %v781 = vpop.permute.xlu0 %780
  %782 = vset.pattern.permute.xlu0 0
  %783 = vperm.xlu0 %782, %v763
  %v784 = vpop.permute.xlu0 %783
  %785 = vset.pattern.permute.xlu0 0
  %786 = vperm.xlu0 %785, %v764
  %v787 = vpop.permute.xlu0 %786
  %788 = vset.pattern.permute.xlu0 0
  %789 = vperm.xlu0 %788, %v765
  %v790 = vpop.permute.xlu0 %789
  %791 = vset.pattern.permute.xlu0 0
  %792 = vperm.xlu0 %791, %v766
  %v793 = vpop.permute.xlu0 %792
  %794 = vset.pattern.permute.xlu0 0
  %795 = vperm.xlu0 %794, %v767
  %v796 = vpop.permute.xlu0 %795
  %797 = vset.pattern.permute.xlu0 0
  %798 = vperm.xlu0 %797, %v768
  %v799 = vpop.permute.xlu0 %798
  %800 = vset.pattern.permute.xlu0 0
  %801 = vperm.xlu0 %800, %v769
  %v802 = vpop.permute.xlu0 %801
  %803 = vset.pattern.permute.xlu0 0
  %804 = vperm.xlu0 %803, %v770
  %v805 = vpop.permute.xlu0 %804
  %806 = vset.pattern.permute.xlu0 0
  %807 = vperm.xlu0 %806, %v771
  %v808 = vpop.permute.xlu0 %807
  %809 = vset.pattern.permute.xlu0 0
  %810 = vperm.xlu0 %809, %v772
  %v811 = vpop.permute.xlu0 %810
  %812 = vset.pattern.permute.xlu0 0
  %813 = vperm.xlu0 %812, %v773
  %v814 = vpop.permute.xlu0 %813
  %815 = vset.pattern.permute.xlu0 0
  %816 = vperm.xlu0 %815, %v774
  %v817 = vpop.permute.xlu0 %816
  %818 = vset.pattern.permute.xlu0 0
  %819 = vperm.xlu0 %818, %v775
  %v820 = vpop.permute.xlu0 %819
  %821 = vset.pattern.permute.xlu0 0
  %822 = vperm.xlu0 %821, %v776
  %v823 = vpop.permute.xlu0 %822
  %824 = vset.pattern.permute.xlu0 0
  %825 = vperm.xlu0 %824, %v777
  %v826 = vpop.permute.xlu0 %825
  %v827 = vperm.slane %v778, 0
  %vm828 = vcmp.ne.s32.totalorder %v781, %v827
  %vm829 = vcmp.ne.s32.totalorder %v784, %v827
  %vm830 = vcmp.ne.s32.totalorder %v787, %v827
  %vm831 = vcmp.ne.s32.totalorder %v790, %v827
  %vm832 = vcmp.ne.s32.totalorder %v793, %v827
  %vm833 = vcmp.ne.s32.totalorder %v796, %v827
  %vm834 = vcmp.ne.s32.totalorder %v799, %v827
  %vm835 = vcmp.ne.s32.totalorder %v802, %v827
  %vm836 = vcmp.ne.s32.totalorder %v805, %v827
  %vm837 = vcmp.ne.s32.totalorder %v808, %v827
  %vm838 = vcmp.ne.s32.totalorder %v811, %v827
  %vm839 = vcmp.ne.s32.totalorder %v814, %v827
  %vm840 = vcmp.ne.s32.totalorder %v817, %v827
  %vm841 = vcmp.ne.s32.totalorder %v820, %v827
  %vm842 = vcmp.ne.s32.totalorder %v823, %v827
  %vm843 = vcmp.ne.s32.totalorder %v826, %v827
  %vm844 = vcmp.ne.s32.totalorder %v762, 2147483648
  %vm845 = vcmp.ne.s32.totalorder %v763, 2147483648
  %vm846 = vcmp.ne.s32.totalorder %v764, 2147483648
  %vm847 = vcmp.ne.s32.totalorder %v765, 2147483648
  %vm848 = vcmp.ne.s32.totalorder %v766, 2147483648
  %vm849 = vcmp.ne.s32.totalorder %v767, 2147483648
  %vm850 = vcmp.ne.s32.totalorder %v768, 2147483648
  %vm851 = vcmp.ne.s32.totalorder %v769, 2147483648
  %vm852 = vcmp.ne.s32.totalorder %v770, 2147483648
  %vm853 = vcmp.ne.s32.totalorder %v771, 2147483648
  %vm854 = vcmp.ne.s32.totalorder %v772, 2147483648
  %vm855 = vcmp.ne.s32.totalorder %v773, 2147483648
  %vm856 = vcmp.ne.s32.totalorder %v774, 2147483648
  %vm857 = vcmp.ne.s32.totalorder %v775, 2147483648
  %vm858 = vcmp.ne.s32.totalorder %v776, 2147483648
  %vm859 = vcmp.ne.s32.totalorder %v777, 2147483648
  %vm860 = vcmp.ne.s32.totalorder %v778, 2147483648
  %v861 = vsel %vm844, 1, 0
  %v862 = vsel %vm845, 1, 0
  %v863 = vsel %vm846, 1, 0
  %v864 = vsel %vm847, 1, 0
  %v865 = vsel %vm848, 1, 0
  %v866 = vsel %vm849, 1, 0
  %v867 = vsel %vm850, 1, 0
  %v868 = vsel %vm851, 1, 0
  %v869 = vsel %vm852, 1, 0
  %v870 = vsel %vm853, 1, 0
  %v871 = vsel %vm854, 1, 0
  %v872 = vsel %vm855, 1, 0
  %v873 = vsel %vm856, 1, 0
  %v874 = vsel %vm857, 1, 0
  %v875 = vsel %vm858, 1, 0
  %v876 = vsel %vm859, 1, 0
  %877 = vset.pattern.permute.xlu0 0
  %878 = vperm.xlu0 %877, %v861
  %v879 = vpop.permute.xlu0 %878
  %880 = vset.pattern.permute.xlu0 0
  %881 = vperm.xlu0 %880, %v862
  %v882 = vpop.permute.xlu0 %881
  %883 = vset.pattern.permute.xlu0 0
  %884 = vperm.xlu0 %883, %v863
  %v885 = vpop.permute.xlu0 %884
  %886 = vset.pattern.permute.xlu0 0
  %887 = vperm.xlu0 %886, %v864
  %v888 = vpop.permute.xlu0 %887
  %889 = vset.pattern.permute.xlu0 0
  %890 = vperm.xlu0 %889, %v865
  %v891 = vpop.permute.xlu0 %890
  %892 = vset.pattern.permute.xlu0 0
  %893 = vperm.xlu0 %892, %v866
  %v894 = vpop.permute.xlu0 %893
  %895 = vset.pattern.permute.xlu0 0
  %896 = vperm.xlu0 %895, %v867
  %v897 = vpop.permute.xlu0 %896
  %898 = vset.pattern.permute.xlu0 0
  %899 = vperm.xlu0 %898, %v868
  %v900 = vpop.permute.xlu0 %899
  %901 = vset.pattern.permute.xlu0 0
  %902 = vperm.xlu0 %901, %v869
  %v903 = vpop.permute.xlu0 %902
  %904 = vset.pattern.permute.xlu0 0
  %905 = vperm.xlu0 %904, %v870
  %v906 = vpop.permute.xlu0 %905
  %907 = vset.pattern.permute.xlu0 0
  %908 = vperm.xlu0 %907, %v871
  %v909 = vpop.permute.xlu0 %908
  %910 = vset.pattern.permute.xlu0 0
  %911 = vperm.xlu0 %910, %v872
  %v912 = vpop.permute.xlu0 %911
  %913 = vset.pattern.permute.xlu0 0
  %914 = vperm.xlu0 %913, %v873
  %v915 = vpop.permute.xlu0 %914
  %916 = vset.pattern.permute.xlu0 0
  %917 = vperm.xlu0 %916, %v874
  %v918 = vpop.permute.xlu0 %917
  %919 = vset.pattern.permute.xlu0 0
  %920 = vperm.xlu0 %919, %v875
  %v921 = vpop.permute.xlu0 %920
  %922 = vset.pattern.permute.xlu0 0
  %923 = vperm.xlu0 %922, %v876
  %v924 = vpop.permute.xlu0 %923
  %vm925 = vcmp.eq.s32.totalorder %v879, 1
  %vm926 = vcmp.eq.s32.totalorder %v882, 1
  %vm927 = vcmp.eq.s32.totalorder %v885, 1
  %vm928 = vcmp.eq.s32.totalorder %v888, 1
  %vm929 = vcmp.eq.s32.totalorder %v891, 1
  %vm930 = vcmp.eq.s32.totalorder %v894, 1
  %vm931 = vcmp.eq.s32.totalorder %v897, 1
  %vm932 = vcmp.eq.s32.totalorder %v900, 1
  %vm933 = vcmp.eq.s32.totalorder %v903, 1
  %vm934 = vcmp.eq.s32.totalorder %v906, 1
  %vm935 = vcmp.eq.s32.totalorder %v909, 1
  %vm936 = vcmp.eq.s32.totalorder %v912, 1
  %vm937 = vcmp.eq.s32.totalorder %v915, 1
  %vm938 = vcmp.eq.s32.totalorder %v918, 1
  %vm939 = vcmp.eq.s32.totalorder %v921, 1
  %vm940 = vcmp.eq.s32.totalorder %v924, 1
  %v941 = vsel %vm860, 1, 0
  %v942 = vperm.slane %v941, 0
  %vm943 = vcmp.eq.s32.totalorder %v942, 1
  %vm944 = vmand %vm925, %vm943
  %vm945 = vmand %vm926, %vm943
  %vm946 = vmand %vm927, %vm943
  %vm947 = vmand %vm928, %vm943
  %vm948 = vmand %vm929, %vm943
  %vm949 = vmand %vm930, %vm943
  %vm950 = vmand %vm931, %vm943
  %vm951 = vmand %vm932, %vm943
  %vm952 = vmand %vm933, %vm943
  %vm953 = vmand %vm934, %vm943
  %vm954 = vmand %vm935, %vm943
  %vm955 = vmand %vm936, %vm943
  %vm956 = vmand %vm937, %vm943
  %vm957 = vmand %vm938, %vm943
  %vm958 = vmand %vm939, %vm943
  %vm959 = vmand %vm940, %vm943
  %vm960 = vmand %vm828, %vm944
  %vm961 = vmand %vm829, %vm945
  %vm962 = vmand %vm830, %vm946
  %vm963 = vmand %vm831, %vm947
  %vm964 = vmand %vm832, %vm948
  %vm965 = vmand %vm833, %vm949
  %vm966 = vmand %vm834, %vm950
  %vm967 = vmand %vm835, %vm951
  %vm968 = vmand %vm836, %vm952
  %vm969 = vmand %vm837, %vm953
  %vm970 = vmand %vm838, %vm954
  %vm971 = vmand %vm839, %vm955
  %vm972 = vmand %vm840, %vm956
  %vm973 = vmand %vm841, %vm957
  %vm974 = vmand %vm842, %vm958
  %vm975 = vmand %vm843, %vm959
  %v976 = vsub.f32 %v715, 0.3
  %v977 = vsub.f32 %v718, 0.3
  %v978 = vsub.f32 %v721, 0.3
  %v979 = vsub.f32 %v724, 0.3
  %v980 = vsub.f32 %v727, 0.3
  %v981 = vsub.f32 %v730, 0.3
  %v982 = vsub.f32 %v733, 0.3
  %v983 = vsub.f32 %v736, 0.3
  %v984 = vsub.f32 %v739, 0.3
  %v985 = vsub.f32 %v742, 0.3
  %v986 = vsub.f32 %v745, 0.3
  %v987 = vsub.f32 %v748, 0.3
  %v988 = vsub.f32 %v751, 0.3
  %v989 = vsub.f32 %v754, 0.3
  %v990 = vsub.f32 %v757, 0.3
  %v991 = vsub.f32 %v760, 0.3
  %v992 = vmax.f32 %v976, 0.0
  %v993 = vmax.f32 %v977, 0.0
  %v994 = vmax.f32 %v978, 0.0
  %v995 = vmax.f32 %v979, 0.0
  %v996 = vmax.f32 %v980, 0.0
  %v997 = vmax.f32 %v981, 0.0
  %v998 = vmax.f32 %v982, 0.0
  %v999 = vmax.f32 %v983, 0.0
  %v1000 = vmax.f32 %v984, 0.0
  %v1001 = vmax.f32 %v985, 0.0
  %v1002 = vmax.f32 %v986, 0.0
  %v1003 = vmax.f32 %v987, 0.0
  %v1004 = vmax.f32 %v988, 0.0
  %v1005 = vmax.f32 %v989, 0.0
  %v1006 = vmax.f32 %v990, 0.0
  %v1007 = vmax.f32 %v991, 0.0
  %s1008 = sld [smem:[#allocation3]]
  %v1009 = vsel %vm960, %v992, 0.0
  %v1010 = vsel %vm961, %v993, 0.0
  %v1011 = vsel %vm962, %v994, 0.0
  %v1012 = vsel %vm963, %v995, 0.0
  %v1013 = vsel %vm964, %v996, 0.0
  %v1014 = vsel %vm965, %v997, 0.0
  %v1015 = vsel %vm966, %v998, 0.0
  %v1016 = vsel %vm967, %v999, 0.0
  %v1017 = vsel %vm968, %v1000, 0.0
  %v1018 = vsel %vm969, %v1001, 0.0
  %v1019 = vsel %vm970, %v1002, 0.0
  %v1020 = vsel %vm971, %v1003, 0.0
  %v1021 = vsel %vm972, %v1004, 0.0
  %v1022 = vsel %vm973, %v1005, 0.0
  %v1023 = vsel %vm974, %v1006, 0.0
  %v1024 = vsel %vm975, %v1007, 0.0
  %v1025 = vadd.f32 %v1009, %v1010
  %v1026 = vadd.f32 %v1025, %v1011
  %v1027 = vadd.f32 %v1026, %v1012
  %v1028 = vadd.f32 %v1027, %v1013
  %v1029 = vadd.f32 %v1028, %v1014
  %v1030 = vadd.f32 %v1029, %v1015
  %v1031 = vadd.f32 %v1030, %v1016
  %v1032 = vadd.f32 %v1031, %v1017
  %v1033 = vadd.f32 %v1032, %v1018
  %v1034 = vadd.f32 %v1033, %v1019
  %v1035 = vadd.f32 %v1034, %v1020
  %v1036 = vadd.f32 %v1035, %v1021
  %v1037 = vadd.f32 %v1036, %v1022
  %v1038 = vadd.f32 %v1037, %v1023
  %v1039 = vadd.f32 %v1038, %v1024
  %1040 = vadd.xlane.f32.xlu0 %v1039
  %v1041 = vpop.xlane.xlu0 %1040
  %v1042 = vrot.slane %v1041, 4
  %v1043 = vadd.f32 %v1041, %v1042
  %v1044 = vrot.slane %v1043, 2
  %v1045 = vadd.f32 %v1043, %v1044
  %v1046 = vrot.slane %v1045, 1
  %v1047 = vadd.f32 %v1045, %v1046
  %s1048 = vtos %v1047
  %s1049 = sadd.f32 %s1008, %s1048
  %s1050 = scalar_lea.smem [#allocation3], 0
  %1051 = sst [smem:[%s1050]] %s1049
  %p1052 = scmp.eq.s32.totalorder 0, 0
  // Predicated region
  $region22: #{contrastive_loss.1} parent=0 // pred_check
    %p1053 = pneg %p1052
  $region23: #{contrastive_loss.1} parent=0 // pred_check_branch
    %1055 = sbr.rel (%p1053) target = $region25
  $region24: #{contrastive_loss.1} parent=0 // pred_region
    %v1056 = vlaneseq
    %v1057 = vshrl.u32 %v1056, 7
    %v1058 = vadd.s32 %v1057, 8
    %v1059 = vadd.s32 %v1057, 16
    %v1060 = vadd.s32 %v1057, 24
    %v1061 = vadd.s32 %v1057, 32
    %v1062 = vadd.s32 %v1057, 40
    %v1063 = vadd.s32 %v1057, 48
    %v1064 = vadd.s32 %v1057, 56
    %v1065 = vadd.s32 %v1057, 64
    %v1066 = vadd.s32 %v1057, 72
    %v1067 = vadd.s32 %v1057, 80
    %v1068 = vadd.s32 %v1057, 88
    %v1069 = vadd.s32 %v1057, 96
    %v1070 = vadd.s32 %v1057, 104
    %v1071 = vadd.s32 %v1057, 112
    %v1072 = vadd.s32 %v1057, 120
    %v1073 = vlaneseq
    %v1074 = vand.u32 %v1073, 127
    %vm1075 = vcmp.eq.s32.totalorder %v1057, %v1074
    %vm1076 = vcmp.eq.s32.totalorder %v1058, %v1074
    %vm1077 = vcmp.eq.s32.totalorder %v1059, %v1074
    %vm1078 = vcmp.eq.s32.totalorder %v1060, %v1074
    %vm1079 = vcmp.eq.s32.totalorder %v1061, %v1074
    %vm1080 = vcmp.eq.s32.totalorder %v1062, %v1074
    %vm1081 = vcmp.eq.s32.totalorder %v1063, %v1074
    %vm1082 = vcmp.eq.s32.totalorder %v1064, %v1074
    %vm1083 = vcmp.eq.s32.totalorder %v1065, %v1074
    %vm1084 = vcmp.eq.s32.totalorder %v1066, %v1074
    %vm1085 = vcmp.eq.s32.totalorder %v1067, %v1074
    %vm1086 = vcmp.eq.s32.totalorder %v1068, %v1074
    %vm1087 = vcmp.eq.s32.totalorder %v1069, %v1074
    %vm1088 = vcmp.eq.s32.totalorder %v1070, %v1074
    %vm1089 = vcmp.eq.s32.totalorder %v1071, %v1074
    %vm1090 = vcmp.eq.s32.totalorder %v1072, %v1074
    %s1091 = smul.u32 0, 128
    %v1092 = vstv %s1091
    %v1093 = vadd.s32 %v1092, %v1057
    %v1094 = vadd.s32 %v1092, %v1058
    %v1095 = vadd.s32 %v1092, %v1059
    %v1096 = vadd.s32 %v1092, %v1060
    %v1097 = vadd.s32 %v1092, %v1061
    %v1098 = vadd.s32 %v1092, %v1062
    %v1099 = vadd.s32 %v1092, %v1063
    %v1100 = vadd.s32 %v1092, %v1064
    %v1101 = vadd.s32 %v1092, %v1065
    %v1102 = vadd.s32 %v1092, %v1066
    %v1103 = vadd.s32 %v1092, %v1067
    %v1104 = vadd.s32 %v1092, %v1068
    %v1105 = vadd.s32 %v1092, %v1069
    %v1106 = vadd.s32 %v1092, %v1070
    %v1107 = vadd.s32 %v1092, %v1071
    %v1108 = vadd.s32 %v1092, %v1072
    %vm1109 = vcmp.lt.s32.totalorder %v1093, 8
    %vm1110 = vcmp.lt.s32.totalorder %v1094, 8
    %vm1111 = vcmp.lt.s32.totalorder %v1095, 8
    %vm1112 = vcmp.lt.s32.totalorder %v1096, 8
    %vm1113 = vcmp.lt.s32.totalorder %v1097, 8
    %vm1114 = vcmp.lt.s32.totalorder %v1098, 8
    %vm1115 = vcmp.lt.s32.totalorder %v1099, 8
    %vm1116 = vcmp.lt.s32.totalorder %v1100, 8
    %vm1117 = vcmp.lt.s32.totalorder %v1101, 8
    %vm1118 = vcmp.lt.s32.totalorder %v1102, 8
    %vm1119 = vcmp.lt.s32.totalorder %v1103, 8
    %vm1120 = vcmp.lt.s32.totalorder %v1104, 8
    %vm1121 = vcmp.lt.s32.totalorder %v1105, 8
    %vm1122 = vcmp.lt.s32.totalorder %v1106, 8
    %vm1123 = vcmp.lt.s32.totalorder %v1107, 8
    %vm1124 = vcmp.lt.s32.totalorder %v1108, 8
    %vm1125 = vmand %vm1075, %vm1109
    %vm1126 = vmand %vm1076, %vm1110
    %vm1127 = vmand %vm1077, %vm1111
    %vm1128 = vmand %vm1078, %vm1112
    %vm1129 = vmand %vm1079, %vm1113
    %vm1130 = vmand %vm1080, %vm1114
    %vm1131 = vmand %vm1081, %vm1115
    %vm1132 = vmand %vm1082, %vm1116
    %vm1133 = vmand %vm1083, %vm1117
    %vm1134 = vmand %vm1084, %vm1118
    %vm1135 = vmand %vm1085, %vm1119
    %vm1136 = vmand %vm1086, %vm1120
    %vm1137 = vmand %vm1087, %vm1121
    %vm1138 = vmand %vm1088, %vm1122
    %vm1139 = vmand %vm1089, %vm1123
    %vm1140 = vmand %vm1090, %vm1124
    %s1141 = sld [smem:[#allocation3]]
    %v1142 = vsub.f32 1.0, %v715
    %v1143 = vsub.f32 1.0, %v718
    %v1144 = vsub.f32 1.0, %v721
    %v1145 = vsub.f32 1.0, %v724
    %v1146 = vsub.f32 1.0, %v727
    %v1147 = vsub.f32 1.0, %v730
    %v1148 = vsub.f32 1.0, %v733
    %v1149 = vsub.f32 1.0, %v736
    %v1150 = vsub.f32 1.0, %v739
    %v1151 = vsub.f32 1.0, %v742
    %v1152 = vsub.f32 1.0, %v745
    %v1153 = vsub.f32 1.0, %v748
    %v1154 = vsub.f32 1.0, %v751
    %v1155 = vsub.f32 1.0, %v754
    %v1156 = vsub.f32 1.0, %v757
    %v1157 = vsub.f32 1.0, %v760
    %v1158 = vsel %vm1125, %v1142, 0.0
    %v1159 = vsel %vm1126, %v1143, 0.0
    %v1160 = vsel %vm1127, %v1144, 0.0
    %v1161 = vsel %vm1128, %v1145, 0.0
    %v1162 = vsel %vm1129, %v1146, 0.0
    %v1163 = vsel %vm1130, %v1147, 0.0
    %v1164 = vsel %vm1131, %v1148, 0.0
    %v1165 = vsel %vm1132, %v1149, 0.0
    %v1166 = vsel %vm1133, %v1150, 0.0
    %v1167 = vsel %vm1134, %v1151, 0.0
    %v1168 = vsel %vm1135, %v1152, 0.0
    %v1169 = vsel %vm1136, %v1153, 0.0
    %v1170 = vsel %vm1137, %v1154, 0.0
    %v1171 = vsel %vm1138, %v1155, 0.0
    %v1172 = vsel %vm1139, %v1156, 0.0
    %v1173 = vsel %vm1140, %v1157, 0.0
    %v1174 = vadd.f32 %v1158, %v1159
    %v1175 = vadd.f32 %v1174, %v1160
    %v1176 = vadd.f32 %v1175, %v1161
    %v1177 = vadd.f32 %v1176, %v1162
    %v1178 = vadd.f32 %v1177, %v1163
    %v1179 = vadd.f32 %v1178, %v1164
    %v1180 = vadd.f32 %v1179, %v1165
    %v1181 = vadd.f32 %v1180, %v1166
    %v1182 = vadd.f32 %v1181, %v1167
    %v1183 = vadd.f32 %v1182, %v1168
    %v1184 = vadd.f32 %v1183, %v1169
    %v1185 = vadd.f32 %v1184, %v1170
    %v1186 = vadd.f32 %v1185, %v1171
    %v1187 = vadd.f32 %v1186, %v1172
    %v1188 = vadd.f32 %v1187, %v1173
    %1189 = vadd.xlane.f32.xlu0 %v1188
    %v1190 = vpop.xlane.xlu0 %1189
    %v1191 = vrot.slane %v1190, 4
    %v1192 = vadd.f32 %v1190, %v1191
    %v1193 = vrot.slane %v1192, 2
    %v1194 = vadd.f32 %v1192, %v1193
    %v1195 = vrot.slane %v1194, 1
    %v1196 = vadd.f32 %v1194, %v1195
    %s1197 = vtos %v1196
    %s1198 = sadd.f32 %s1141, %s1197
    %1199 = sst [smem:[%s1050]] %s1198
  $region25: #{contrastive_loss.1} parent=0 // pred_fallthru
    _
  // Predicated region
  $region26: #{contrastive_loss.1} parent=0 // pred_check
    %p1200 = pneg %p17
  $region27: #{contrastive_loss.1} parent=0 // pred_check_branch
    %1202 = sbr.rel (%p1200) target = $region29
  $region28: #{contrastive_loss.1} parent=0 // pred_region
    %v1203 = vlaneseq
    %v1204 = vand.u32 %v1203, 127
    %vm1205 = vcmp.eq.s32.totalorder %v1204, 0
    %s1206 = sld [smem:[#allocation3]]
    %v1207 = vstv %s1206
    %v1208 = vsel %vm1205, %v1207, 0.0
    %1209 = vst [vmem:[%s4] sm:$0x1] %v1208
  $region29: #{contrastive_loss.1} parent=0 // pred_fallthru
    _
  // Predicated region
  $region30: #{contrastive_loss.1} parent=0 // pred_check
    _
  $region31: #{contrastive_loss.1} parent=0 // pred_check_branch
    %1211 = sbr.rel (0) target = $region33
  $region32: #{contrastive_loss.1} parent=0 // pred_region
    _
  $region33: #{contrastive_loss.1} parent=0 // pred_fallthru
    _
  // Predicated region
  $region34: #{contrastive_loss.1} parent=0 // pred_check
    _
  $region35: #{contrastive_loss.1} parent=0 // pred_check_branch
    %1213 = sbr.rel (0) target = $region37
  $region36: #{contrastive_loss.1} parent=0 // pred_region
    _
  $region37: #{contrastive_loss.1} parent=0 // pred_fallthru
    _

</llo_original>
